<compile_context>
chip_gen: v7x
topology: tpu7x:2x2x1
jax: 0.10.0
libtpu: 0.0.40
codegen_flags: <defaults>
</compile_context>

<pallas_src>
import functools

import jax
import jax.numpy as jnp
from jax.experimental import pallas as pl
from jax.experimental.pallas import tpu as pltpu


def _round_up(x, m):
    return (x + m - 1) // m * m


def _patch_embed_kernel(p_ref, w_ref, pp_ref, o_ref):
    # p_ref:  (1, tm, Kp)  bf16 patch tile for one batch element
    # w_ref:  (Kp, tn)     bf16 flattened conv-weight tile (resident)
    # pp_ref: (tm, tn)     f32 precomputed (pos_emb[1:] + conv_bias) tile
    # o_ref:  (1, tm, tn)  f32 output tile
    emb = jnp.dot(p_ref[0], w_ref[...], preferred_element_type=jnp.float32)
    o_ref[0] = (emb + pp_ref[...]).astype(o_ref.dtype)


def input_layer_forward(x, conv_w, conv_b, cls_token, pos_emb, patch_size):
    """ViT input layer: patch-embed conv (as matmul) + cls token + pos embed.

    x:        [B, C, H, W]  (NCHW, like PyTorch)
    conv_w:   [E, C, p, p]
    conv_b:   [E]
    cls_token:[1, 1, E]
    pos_emb:  [1, nb_patch+1, E]
    returns:  [B, nb_patch+1, E]  (float32)
    """
    B, C, H, W = x.shape
    p = patch_size
    E = conv_w.shape[0]
    Hp, Wp = H // p, W // p
    nb_patch = Hp * Wp
    K = C * p * p

    # --- glue: extract non-overlapping patches in bf16 (cast BEFORE the
    #     transpose so the materialized patch tensor is half-width). ---
    xb = x.astype(jnp.bfloat16)
    xr = xb.reshape(B, C, Hp, p, Wp, p).transpose(0, 2, 4, 1, 3, 5)
    patches = xr.reshape(B, nb_patch, K)                     # (B, nb_patch, K) bf16

    w_mat = conv_w.reshape(E, K).T.astype(jnp.bfloat16)      # (K, E) bf16
    pos = pos_emb.reshape(nb_patch + 1, E).astype(jnp.float32)
    # Batch-invariant adds precomputed once: pos[1:] + bias  and  cls + pos[0].
    pos_plus_bias = pos[1:] + conv_b.reshape(1, E).astype(jnp.float32)  # (nb_patch, E)
    row0 = cls_token.reshape(1, E).astype(jnp.float32) + pos[0:1]       # (1, E)

    # --- tiling: 8-aligned row tiles, 128-lane-aligned column tiles,
    #     K kept whole (padded to a lane multiple).  Bounded per-step VMEM
    #     so the same kernel scales to large ViT configs (fits v7x 64 MiB). ---
    tm = min(256, _round_up(nb_patch, 8))
    tn = min(512, _round_up(E, 128))
    Mp = _round_up(nb_patch, tm)
    Ep = _round_up(E, tn)
    Kp = _round_up(K, 128)

    patches_p = jnp.pad(patches, ((0, 0), (0, Mp - nb_patch), (0, Kp - K)))
    w_p = jnp.pad(w_mat, ((0, Kp - K), (0, Ep - E)))
    pp_p = jnp.pad(pos_plus_bias, ((0, Mp - nb_patch), (0, Ep - E)))

    grid = (B, Mp // tm, Ep // tn)
    flops = 2 * B * Mp * Kp * Ep
    bytes_accessed = (patches_p.size * 2 + w_p.size * 2 + pp_p.size * 4
                      + B * Mp * Ep * 4)

    out = pl.pallas_call(
        _patch_embed_kernel,
        out_shape=jax.ShapeDtypeStruct((B, Mp, Ep), jnp.float32),
        grid_spec=pltpu.PrefetchScalarGridSpec(
            num_scalar_prefetch=0,
            grid=grid,
            in_specs=[
                pl.BlockSpec((1, tm, Kp), lambda b, i, j: (b, i, 0)),
                pl.BlockSpec((Kp, tn), lambda b, i, j: (0, j)),
                pl.BlockSpec((tm, tn), lambda b, i, j: (i, j)),
            ],
            out_specs=pl.BlockSpec((1, tm, tn), lambda b, i, j: (b, i, j)),
        ),
        compiler_params=pltpu.CompilerParams(
            dimension_semantics=("parallel", "parallel", "parallel")),
        cost_estimate=pl.CostEstimate(
            flops=flops, transcendentals=0, bytes_accessed=bytes_accessed),
    )(patches_p, w_p, pp_p)

    patch_tokens = out[:, :nb_patch, :E]                     # drop padding
    cls_row = jnp.broadcast_to(row0.reshape(1, 1, E), (B, 1, E))
    return jnp.concatenate([cls_row, patch_tokens], axis=1)  # (B, nb_patch+1, E)


def reference_forward(x, conv_w, conv_b, cls_token, pos_emb, patch_size):
    """Pure-JAX f32 reference mirroring the PyTorch module."""
    B = x.shape[0]
    out = jax.lax.conv_general_dilated(
        x.astype(jnp.float32), conv_w.astype(jnp.float32),
        window_strides=(patch_size, patch_size), padding="VALID",
        dimension_numbers=("NCHW", "OIHW", "NCHW"))
    out = out + conv_b.reshape(1, -1, 1, 1)
    B_, E, Hp, Wp = out.shape
    out = out.reshape(B_, E, Hp * Wp).transpose(0, 2, 1)     # B, nb_patch, E
    cls = jnp.broadcast_to(cls_token, (B, 1, cls_token.shape[-1]))
    out = jnp.concatenate([cls, out], axis=1)
    return out + pos_emb


if __name__ == "__main__":
    # Small ViT-ish config
    B, C, H, W = 2, 4, 16, 16
    patch_size = 4
    embed_dim = 32
    nb_patch = (H // patch_size) * (W // patch_size)

    key = jax.random.PRNGKey(0)
    kx, kw, kb, kc, kp = jax.random.split(key, 5)

    x = jax.random.normal(kx, (B, C, H, W), dtype=jnp.float32)
    conv_w = jax.random.normal(
        kw, (embed_dim, C, patch_size, patch_size), dtype=jnp.float32) * 0.05
    conv_b = jax.random.normal(kb, (embed_dim,), dtype=jnp.float32) * 0.05
    cls_token = jax.random.normal(kc, (1, 1, embed_dim), dtype=jnp.float32)
    pos_emb = jax.random.normal(
        kp, (1, nb_patch + 1, embed_dim), dtype=jnp.float32)

    fwd = jax.jit(functools.partial(input_layer_forward, patch_size=patch_size))
    out = fwd(x, conv_w, conv_b, cls_token, pos_emb)
    out = jax.block_until_ready(out)

    ref = reference_forward(x, conv_w, conv_b, cls_token, pos_emb, patch_size)
    assert out.shape == (B, nb_patch + 1, embed_dim), out.shape
    # Tolerance reflects the intentional bf16 MXU inputs (f32 accumulation).
    assert jnp.allclose(out, ref, atol=3e-2, rtol=3e-2), \
        float(jnp.max(jnp.abs(out - ref)))

    print("KERNEL_OK")
</pallas_src>

<mosaic_0001>
module attributes {stable_mosaic.version = 11 : i64} {
  func.func @_patch_embed_kernel(%arg0: i32, %arg1: i32, %arg2: i32, %arg3: memref<1x16x128xbf16, #tpu.memory_space<vmem>>, %arg4: memref<128x128xbf16, #tpu.memory_space<vmem>>, %arg5: memref<16x128xf32, #tpu.memory_space<vmem>>, %arg6: memref<1x16x128xf32, #tpu.memory_space<vmem>>) attributes {dimension_semantics = [#tpu.dimension_semantics<parallel>, #tpu.dimension_semantics<parallel>, #tpu.dimension_semantics<parallel>], iteration_bounds = array<i64: 2, 1, 1>, scalar_prefetch = 0 : i64, scratch_operands = 0 : i64, tpu.core_type = #tpu.core_type<tc>, window_params = [{transform_indices = @transform_0, window_bounds = array<i64: 1, 16, 128>}, {transform_indices = @transform_1, window_bounds = array<i64: 128, 128>}, {transform_indices = @transform_2, window_bounds = array<i64: 16, 128>}, {transform_indices = @transform_3, window_bounds = array<i64: 1, 16, 128>}]} {
    %c0 = arith.constant 0 : index
    %c0_0 = arith.constant 0 : index
    %c0_1 = arith.constant 0 : index
    %0 = vector.load %arg3[%c0, %c0_0, %c0_1] : memref<1x16x128xbf16, #tpu.memory_space<vmem>>, vector<1x16x128xbf16>
    %1 = vector.shape_cast %0 : vector<1x16x128xbf16> to vector<16x128xbf16>
    %c0_2 = arith.constant 0 : index
    %c0_3 = arith.constant 0 : index
    %2 = vector.load %arg4[%c0_2, %c0_3] : memref<128x128xbf16, #tpu.memory_space<vmem>>, vector<128x128xbf16>
    %cst = arith.constant dense<0.000000e+00> : vector<16x128xf32>
    %3 = tpu.matmul %1, %2, %cst {dimension_numbers = #tpu.dot_dimension_numbers<[1], [0], [0], [1], [0, 0, 1, 1], [], []>} : vector<16x128xbf16>, vector<128x128xbf16>, vector<16x128xf32> -> vector<16x128xf32>
    %c0_4 = arith.constant 0 : index
    %c0_5 = arith.constant 0 : index
    %4 = vector.load %arg5[%c0_4, %c0_5] : memref<16x128xf32, #tpu.memory_space<vmem>>, vector<16x128xf32>
    %5 = arith.addf %3, %4 : vector<16x128xf32>
    %c0_6 = arith.constant 0 : index
    %c0_7 = arith.constant 0 : index
    %c0_8 = arith.constant 0 : index
    %6 = vector.load %arg6[%c0_6, %c0_7, %c0_8] : memref<1x16x128xf32, #tpu.memory_space<vmem>>, vector<1x16x128xf32>
    %7 = vector.shape_cast %6 : vector<1x16x128xf32> to vector<16x128xf32>
    %8 = vector.shape_cast %5 : vector<16x128xf32> to vector<1x16x128xf32>
    tpu.vector_store %arg6[%c0_6, %c0_7, %c0_8], %8 {strides = array<i32>} : memref<1x16x128xf32, #tpu.memory_space<vmem>>, vector<1x16x128xf32>,
    return
  }
  func.func @transform_0(%arg0: i32, %arg1: i32, %arg2: i32) -> (i32, i32, i32) {
    %c0_i32 = arith.constant 0 : i32
    %c0_i32_0 = arith.constant 0 : i32
    return %arg0, %arg1, %c0_i32 : i32, i32, i32
  }
  func.func @transform_1(%arg0: i32, %arg1: i32, %arg2: i32) -> (i32, i32) {
    %c0_i32 = arith.constant 0 : i32
    %c0_i32_0 = arith.constant 0 : i32
    return %c0_i32, %arg2 : i32, i32
  }
  func.func @transform_2(%arg0: i32, %arg1: i32, %arg2: i32) -> (i32, i32) {
    %c0_i32 = arith.constant 0 : i32
    return %arg1, %arg2 : i32, i32
  }
  func.func @transform_3(%arg0: i32, %arg1: i32, %arg2: i32) -> (i32, i32, i32) {
    %c0_i32 = arith.constant 0 : i32
    return %arg0, %arg1, %arg2 : i32, i32, i32
  }
}

</mosaic_0001>

<llo_original>
// kernel: input_layer_forward.1
$region0: #{input_layer_forward.1}
  #allocation0 [shape = 'u32[]', space=smem, size = 0x4, offset = 0x4, fixed_abs, tag = 'smem constant byte address 0x4 - core index']
  #allocation1 [shape = 'u32[144,128]{1,0:T(1,128)}', space=vmem, size = 0x12000, scoped, tag = 'internal scratch']
  %s0 = inlined_call_operand.vmem [shape: bf16[2,16,128], index: 0, kind: input, shape index: {}]
  %s1 = inlined_call_operand.vmem [shape: bf16[128,128], index: 1, kind: input, shape index: {}]
  %s2 = inlined_call_operand.vmem [shape: f32[16,128], index: 2, kind: input, shape index: {}]
  %s3 = inlined_call_operand.vmem [shape: f32[2,16,128], index: 3, kind: output, shape index: {}]
  %s4 = sld [smem:[#allocation0]]
  $region45: #{input_layer_forward.1} parent=0
    _
  %s6 = ssub.s32 1, %s4
  %s7 = scalar_select 0, %s6, %s4
  loop: start=0, step=1, limit=4
  $region2: #{input_layer_forward.1} parent=0 // loop_pre_header
    _
  $region3: #{input_layer_forward.1} parent=0 // loop_header
    %s9 = sphi 0, %s13
    %p10 = scmp.ge.s32.totalorder %s9, 4
    %s16 = sphi 0, %s35
    %s17 = sphi 0, %s31
    %s18 = sphi 0, %s27
    %s19 = sphi 0, %s16
    %s20 = sphi 0, %s17
    %s21 = sphi 0, %s18
    %s22 = sphi 0, %s19
    %s23 = sphi 0, %s20
    %s24 = sphi 0, %s21
    %s40 = sphi 0, %s42
    %s43 = sphi 0, %s40
    %s44 = sphi 0, %s43
    %s60 = sphi 0, %s44
    %s66 = sphi 0, %s68
    %s69 = sphi 0, %s66
    %s70 = sphi 0, %s69
    %s86 = sphi 0, %s70
    %s94 = sphi 0, %s96
    %s97 = sphi 0, %s94
    %s98 = sphi 0, %s97
    %s114 = sphi 0, %s98
    %s124 = sphi 0, %s126
    %s127 = sphi 0, %s124
    %s128 = sphi 0, %s127
    %s144 = sphi 0, %s128
  $region4: #{input_layer_forward.1} parent=0 // loop_header_branch
    %12 = sbr.rel (%p10) target = $region8
  $region5: #{input_layer_forward.1} parent=0 // loop_body
    %s14 = ssub.s32 %s9, 1
    %s15 = ssub.s32 %s9, 2
    %s25 = sadd.s32 1, %s18
    %p26 = scmp.ge.s32.totalorder %s25, 1
    %s27 = scalar_select %p26, 0, %s25
    %s28 = sadd.s32 1, %s17
    %s29 = scalar_select %p26, %s28, %s17
    %p30 = scmp.ge.s32.totalorder %s29, 1
    %s31 = scalar_select %p30, 0, %s29
    %s32 = sadd.s32 1, %s16
    %s33 = scalar_select %p30, %s32, %s16
    %p34 = scmp.ge.s32.totalorder %s33, 2
    %s35 = scalar_select %p34, 0, %s33
    %s36 = ssub.s32 %s16, %s35
    %s37 = ssub.s32 %s17, %s31
    %s38 = sor.u32 %s36, %s37
    %p39 = scmp.eq.s32.totalorder %s38, 0
    %s41 = sadd.s32 %s40, 1
    %s42 = scalar_select %p39, %s40, %s41
    %p45 = pneg %p39
    %p46 = scmp.eq.s32.totalorder %s9, 1
    %p47 = por %p45, %p46
    %p48 = scmp.ne.s32.totalorder %s40, %s43
    %p49 = scmp.eq.s32.totalorder %s9, 0
    %p50 = por %p48, %p49
    %p51 = scmp.ne.s32.totalorder %s40, %s43
    %p52 = scmp.eq.s32.totalorder %s14, 1
    %p53 = por %p51, %p52
    %p54 = scmp.ne.s32.totalorder %s43, %s44
    %p55 = scmp.eq.s32.totalorder %s14, 0
    %p56 = por %p54, %p55
    %p57 = scmp.ne.s32.totalorder %s43, %s44
    %p58 = scmp.eq.s32.totalorder %s15, 1
    %p59 = por %p57, %p58
    %p61 = scmp.ne.s32.totalorder %s44, %s60
    %p62 = scmp.eq.s32.totalorder %s15, 0
    %p63 = por %p61, %p62
    %s64 = ssub.s32 %s18, %s27
    %p65 = scmp.eq.s32.totalorder %s64, 0
    %s67 = sadd.s32 %s66, 1
    %s68 = scalar_select %p65, %s66, %s67
    %p71 = pneg %p65
    %p72 = scmp.eq.s32.totalorder %s9, 1
    %p73 = por %p71, %p72
    %p74 = scmp.ne.s32.totalorder %s66, %s69
    %p75 = scmp.eq.s32.totalorder %s9, 0
    %p76 = por %p74, %p75
    %p77 = scmp.ne.s32.totalorder %s66, %s69
    %p78 = scmp.eq.s32.totalorder %s14, 1
    %p79 = por %p77, %p78
    %p80 = scmp.ne.s32.totalorder %s69, %s70
    %p81 = scmp.eq.s32.totalorder %s14, 0
    %p82 = por %p80, %p81
    %p83 = scmp.ne.s32.totalorder %s69, %s70
    %p84 = scmp.eq.s32.totalorder %s15, 1
    %p85 = por %p83, %p84
    %p87 = scmp.ne.s32.totalorder %s70, %s86
    %p88 = scmp.eq.s32.totalorder %s15, 0
    %p89 = por %p87, %p88
    %s90 = ssub.s32 %s17, %s31
    %s91 = ssub.s32 %s18, %s27
    %s92 = sor.u32 %s90, %s91
    %p93 = scmp.eq.s32.totalorder %s92, 0
    %s95 = sadd.s32 %s94, 1
    %s96 = scalar_select %p93, %s94, %s95
    %p99 = pneg %p93
    %p100 = scmp.eq.s32.totalorder %s9, 1
    %p101 = por %p99, %p100
    %p102 = scmp.ne.s32.totalorder %s94, %s97
    %p103 = scmp.eq.s32.totalorder %s9, 0
    %p104 = por %p102, %p103
    %p105 = scmp.ne.s32.totalorder %s94, %s97
    %p106 = scmp.eq.s32.totalorder %s14, 1
    %p107 = por %p105, %p106
    %p108 = scmp.ne.s32.totalorder %s97, %s98
    %p109 = scmp.eq.s32.totalorder %s14, 0
    %p110 = por %p108, %p109
    %p111 = scmp.ne.s32.totalorder %s97, %s98
    %p112 = scmp.eq.s32.totalorder %s15, 1
    %p113 = por %p111, %p112
    %p115 = scmp.ne.s32.totalorder %s98, %s114
    %p116 = scmp.eq.s32.totalorder %s15, 0
    %p117 = por %p115, %p116
    %s118 = ssub.s32 %s16, %s35
    %s119 = ssub.s32 %s17, %s31
    %s120 = sor.u32 %s118, %s119
    %s121 = ssub.s32 %s18, %s27
    %s122 = sor.u32 %s120, %s121
    %p123 = scmp.eq.s32.totalorder %s122, 0
    %s125 = sadd.s32 %s124, 1
    %s126 = scalar_select %p123, %s124, %s125
    %p129 = pneg %p123
    %p130 = scmp.eq.s32.totalorder %s9, 1
    %p131 = por %p129, %p130
    %p132 = scmp.ne.s32.totalorder %s124, %s127
    %p133 = scmp.eq.s32.totalorder %s9, 0
    %p134 = por %p132, %p133
    %p135 = scmp.ne.s32.totalorder %s124, %s127
    %p136 = scmp.eq.s32.totalorder %s14, 1
    %p137 = por %p135, %p136
    %p138 = scmp.ne.s32.totalorder %s127, %s128
    %p139 = scmp.eq.s32.totalorder %s14, 0
    %p140 = por %p138, %p139
    %p141 = scmp.ne.s32.totalorder %s127, %s128
    %p142 = scmp.eq.s32.totalorder %s15, 1
    %p143 = por %p141, %p142
    %p145 = scmp.ne.s32.totalorder %s128, %s144
    %p146 = scmp.eq.s32.totalorder %s15, 0
    %p147 = por %p145, %p146
    %p148 = scmp.le.s32.totalorder 1, %s9
    %p149 = scmp.lt.s32.totalorder %s9, 3
    %p150 = pnand %p148, %p149
    %p151 = pneg %p150
    // Predicated region
    $region9: #{input_layer_forward.1} parent=5 // pred_check
      _
    $region10: #{input_layer_forward.1} parent=5 // pred_check_branch
      %153 = sbr.rel (%p150) target = $region12
    $region11: #{input_layer_forward.1} parent=5 // pred_region
      %s154 = ssub.s32 %s9, 1
      // Predicated region
      $region13: #{input_layer_forward.1} parent=11 // pred_check
        %p155 = pneg %p82
      $region14: #{input_layer_forward.1} parent=11 // pred_check_branch
        %157 = sbr.rel (%p155) target = $region16
      $region15: #{input_layer_forward.1} parent=11 // pred_region
        %p158 = scmp.lt.s32.totalorder %s21, 0
        %s159 = scalar_select %p158, %s21, 0
        %s160 = smul.addr %s159, 4
        %s161 = scalar_lea.vmem %s1, %s160
      $region16: #{input_layer_forward.1} parent=11 // pred_fallthru
        _
      // Predicated region
      $region17: #{input_layer_forward.1} parent=11 // pred_check
        %p162 = pneg %p110
      $region18: #{input_layer_forward.1} parent=11 // pred_check_branch
        %164 = sbr.rel (%p162) target = $region20
      $region19: #{input_layer_forward.1} parent=11 // pred_region
        %s165 = smul.u32 2, %s20
        %p166 = scmp.lt.s32.totalorder %s165, 1
        %s167 = scalar_select %p166, %s165, 1
        %p168 = scmp.lt.s32.totalorder %s21, 0
        %s169 = scalar_select %p168, %s21, 0
        %s170 = sadd.s32 %s169, %s167
        %s171 = smul.addr %s170, 8
        %s172 = scalar_lea.vmem %s2, %s171
        %s173 = smul.u32 2, %s20
      $region20: #{input_layer_forward.1} parent=11 // pred_fallthru
        _
    $region12: #{input_layer_forward.1} parent=5 // pred_fallthru
      _
    %p174 = scmp.lt.s32.totalorder %s9, 2
    // Predicated region
    $region21: #{input_layer_forward.1} parent=5 // pred_check
      %p175 = pneg %p174
    $region22: #{input_layer_forward.1} parent=5 // pred_check_branch
      %177 = sbr.rel (%p175) target = $region24
    $region23: #{input_layer_forward.1} parent=5 // pred_region
      // Predicated region
      $region25: #{input_layer_forward.1} parent=23 // pred_check
        %p178 = pneg %p50
      $region26: #{input_layer_forward.1} parent=23 // pred_check_branch
        %180 = sbr.rel (%p178) target = $region28
      $region27: #{input_layer_forward.1} parent=23 // pred_region
        %s181 = smul.u32 2, %s17
        %p182 = scmp.lt.s32.totalorder %s16, 1
        %s183 = scalar_select %p182, %s16, 1
        %p184 = scmp.lt.s32.totalorder %s181, 1
        %s185 = scalar_select %p184, %s181, 1
        %s186 = smul.addr %s183, 2
        %s187 = sadd.s32 %s185, %s186
        %s188 = smul.addr %s187, 4
        %s189 = scalar_lea.vmem %s0, %s188
        %s190 = smul.u32 2, %s17
      $region28: #{input_layer_forward.1} parent=23 // pred_fallthru
        _
    $region24: #{input_layer_forward.1} parent=5 // pred_fallthru
      _
    %p191 = scmp.le.s32.totalorder 1, %s9
    %p192 = scmp.lt.s32.totalorder %s9, 3
    %p193 = pnand %p191, %p192
    %p194 = pneg %p193
    // Predicated region
    $region29: #{input_layer_forward.1} parent=5 // pred_check
      _
    $region30: #{input_layer_forward.1} parent=5 // pred_check_branch
      %196 = sbr.rel (%p193) target = $region32
    $region31: #{input_layer_forward.1} parent=5 // pred_region
      %s197 = ssub.s32 %s9, 1
      %s198 = smul.u32 2, %s20
      %p199 = scmp.lt.s32.totalorder %s19, 1
      %s200 = scalar_select %p199, %s19, 1
      %p201 = scmp.lt.s32.totalorder %s198, 1
      %s202 = scalar_select %p201, %s198, 1
      %s203 = smul.addr %s200, 2
      %s204 = sadd.s32 %s202, %s203
      %s205 = smul.addr %s204, 4
      %s206 = scalar_lea.vmem %s0, %s205
      %p207 = pneg %p56
      %p208 = pneg %p53
      %p209 = scmp.lt.s32.totalorder %s21, 0
      %s210 = scalar_select %p209, %s21, 0
      %s211 = smul.addr %s210, 4
      %s212 = scalar_lea.vmem %s1, %s211
      %p213 = pneg %p82
      %p214 = pneg %p79
      %s215 = smul.u32 2, %s20
      %p216 = scmp.lt.s32.totalorder %s215, 1
      %s217 = scalar_select %p216, %s215, 1
      %p218 = scmp.lt.s32.totalorder %s21, 0
      %s219 = scalar_select %p218, %s21, 0
      %s220 = sadd.s32 %s219, %s217
      %s221 = smul.addr %s220, 8
      %s222 = scalar_lea.vmem %s2, %s221
      %p223 = pneg %p110
      %p224 = pneg %p107
      %p225 = pneg %p140
      %p226 = pneg %p137
      %s227 = smul.u32 2, %s20
      %p228 = scmp.lt.s32.totalorder %s19, 1
      %s229 = scalar_select %p228, %s19, 1
      %p230 = scmp.lt.s32.totalorder %s227, 1
      %s231 = scalar_select %p230, %s227, 1
      %p232 = scmp.lt.s32.totalorder %s21, 0
      %s233 = scalar_select %p232, %s21, 0
      %s234 = sadd.s32 %s233, %s231
      %s235 = smul.addr %s229, 2
      %s236 = sadd.s32 %s234, %s235
      %s237 = smul.addr %s236, 8
      %s238 = scalar_lea.vmem %s3, %s237
      %s239 = smul.u32 2, %s20
      %p240 = scmp.lt.s32.totalorder %s19, 1
      %s241 = scalar_select %p240, %s19, 1
      %p242 = scmp.lt.s32.totalorder %s239, 1
      %s243 = scalar_select %p242, %s239, 1
      %s244 = smul.addr %s241, 2
      %s245 = sadd.s32 %s243, %s244
      %s246 = smul.addr %s245, 4
      %s247 = scalar_lea.vmem %s0, %s246
      %s248 = smul.u32 2, %s20
      %p249 = scmp.lt.s32.totalorder %s21, 0
      %s250 = scalar_select %p249, %s21, 0
      %s251 = smul.addr %s250, 4
      %s252 = scalar_lea.vmem %s1, %s251
      %s253 = smul.u32 2, %s20
      %p254 = scmp.lt.s32.totalorder %s253, 1
      %s255 = scalar_select %p254, %s253, 1
      %p256 = scmp.lt.s32.totalorder %s21, 0
      %s257 = scalar_select %p256, %s21, 0
      %s258 = sadd.s32 %s257, %s255
      %s259 = smul.addr %s258, 8
      %s260 = scalar_lea.vmem %s2, %s259
      %s261 = smul.u32 2, %s20
      %s262 = smul.u32 2, %s20
      %p263 = scmp.lt.s32.totalorder %s19, 1
      %s264 = scalar_select %p263, %s19, 1
      %p265 = scmp.lt.s32.totalorder %s262, 1
      %s266 = scalar_select %p265, %s262, 1
      %p267 = scmp.lt.s32.totalorder %s21, 0
      %s268 = scalar_select %p267, %s21, 0
      %s269 = sadd.s32 %s268, %s266
      %s270 = smul.addr %s264, 2
      %s271 = sadd.s32 %s269, %s270
      %s272 = smul.addr %s271, 8
      %s273 = scalar_lea.vmem %s3, %s272
      %s274 = smul.u32 2, %s20
      %v276 = vld [vmem:[%s247] sm:$0xf]
      %v277 = vld [vmem:[%s247 + $0x4] sm:$0xf]
      %v278 = vld [vmem:[%s252] sm:$0xf]
      %v279 = vld [vmem:[%s252 + $0x4] sm:$0xf]
      %v280 = vld [vmem:[%s252 + $0x8] sm:$0xf]
      %v281 = vld [vmem:[%s252 + $0xc] sm:$0xf]
      %v282 = vld [vmem:[%s252 + $0x10] sm:$0xf]
      %v283 = vld [vmem:[%s252 + $0x14] sm:$0xf]
      %v284 = vld [vmem:[%s252 + $0x18] sm:$0xf]
      %v285 = vld [vmem:[%s252 + $0x1c] sm:$0xf]
      %v286 = vld [vmem:[%s252 + $0x20] sm:$0xf]
      %v287 = vld [vmem:[%s252 + $0x24] sm:$0xf]
      %v288 = vld [vmem:[%s252 + $0x28] sm:$0xf]
      %v289 = vld [vmem:[%s252 + $0x2c] sm:$0xf]
      %v290 = vld [vmem:[%s252 + $0x30] sm:$0xf]
      %v291 = vld [vmem:[%s252 + $0x34] sm:$0xf]
      %v292 = vld [vmem:[%s252 + $0x38] sm:$0xf]
      %v293 = vld [vmem:[%s252 + $0x3c] sm:$0xf]
      %v294 = vld [vmem:[%s260] sm:$0xff]
      %v295 = vld [vmem:[%s260 + $0x8] sm:$0xff]
      %v298 = vunpack.c.l.b16 %v276
      %v299 = vunpack.c.l.b16 %v277
      %v300 = vpack.c.b16 %v299, %v298
      %v318 = vunpack.c.l.b16 %v278
      %v319 = vunpack.c.l.b16 %v279
      %v320 = vunpack.c.l.b16 %v280
      %v321 = vunpack.c.l.b16 %v281
      %v322 = vunpack.c.l.b16 %v282
      %v323 = vunpack.c.l.b16 %v283
      %v324 = vunpack.c.l.b16 %v284
      %v325 = vunpack.c.l.b16 %v285
      %v326 = vunpack.c.l.b16 %v286
      %v327 = vunpack.c.l.b16 %v287
      %v328 = vunpack.c.l.b16 %v288
      %v329 = vunpack.c.l.b16 %v289
      %v330 = vunpack.c.l.b16 %v290
      %v331 = vunpack.c.l.b16 %v291
      %v332 = vunpack.c.l.b16 %v292
      %v333 = vunpack.c.l.b16 %v293
      %v334 = vpack.c.b16 %v319, %v318
      %v335 = vpack.c.b16 %v321, %v320
      %v336 = vpack.c.b16 %v323, %v322
      %v337 = vpack.c.b16 %v325, %v324
      %v338 = vpack.c.b16 %v327, %v326
      %v339 = vpack.c.b16 %v329, %v328
      %v340 = vpack.c.b16 %v331, %v330
      %v341 = vpack.c.b16 %v333, %v332
      %350 = vmatprep.subr.bf16.mxu0 0
      %351 = vmatpush1.bf16.msra.mxu0 %v334
      %352 = vmatprep.subr.bf16.mxu0 0
      %353 = vmatpush1.bf16.msra.mxu0 %v335
      %354 = vmatprep.subr.bf16.mxu0 0
      %355 = vmatpush1.bf16.msra.mxu0 %v336
      %356 = vmatprep.subr.bf16.mxu0 0
      %357 = vmatpush1.bf16.msra.mxu0 %v337
      %358 = vmatprep.subr.bf16.mxu0 0
      %359 = vmatpush1.bf16.msra.mxu0 %v338
      %360 = vmatprep.subr.bf16.mxu0 0
      %361 = vmatpush1.bf16.msra.mxu0 %v339
      %362 = vmatprep.subr.bf16.mxu0 0
      %363 = vmatpush1.bf16.msra.mxu0 %v340
      %364 = vmatprep.subr.bf16.mxu0 0
      %365 = vmatpush1.bf16.msra.mxu0 %v341
      %366 = vmatprep.subr.bf16.mxu0 0
      %367 = vmatpush1.bf16.msra.mxu0 0
      %368 = vmatprep.subr.bf16.mxu0 0
      %369 = vmatpush1.bf16.msra.mxu0 0
      %370 = vmatprep.subr.bf16.mxu0 0
      %371 = vmatpush1.bf16.msra.mxu0 0
      %372 = vmatprep.subr.bf16.mxu0 0
      %373 = vmatpush1.bf16.msra.mxu0 0
      %374 = vmatprep.subr.bf16.mxu0 0
      %375 = vmatpush1.bf16.msra.mxu0 0
      %376 = vmatprep.subr.bf16.mxu0 0
      %377 = vmatpush1.bf16.msra.mxu0 0
      %378 = vmatprep.subr.bf16.mxu0 0
      %379 = vmatpush1.bf16.msra.mxu0 0
      %380 = vmatprep.subr.bf16.mxu0 0
      %381 = vmatpush1.bf16.msra.mxu0 0
      %382 = vmatprep.mubr.bf16.mxu0 0
      %383 = vmatmul.mubr.bf16.gmra.mrb[0].mxu0 %v300
      %v384 = vpop.f32.mrb[0].mxu0
      %v385 = vadd.f32 %v294, %v384
      %v386 = vpop.f32.mrb[0].mxu0
      %v387 = vpop.f32.mrb[0].mxu0
      %v388 = vadd.f32 %v295, %v387
      %v389 = vpop.f32.mrb[0].mxu0
      %390 = vdwg.mxu0
      %391 = vst [vmem:[%s273] sm:$0xff] %v385
      %392 = vst [vmem:[%s273 + $0x8] sm:$0xff] %v388
      %s393 = smul.u32 2, %s20
      %p394 = scmp.lt.s32.totalorder %s19, 1
      %s395 = scalar_select %p394, %s19, 1
      %p396 = scmp.lt.s32.totalorder %s393, 1
      %s397 = scalar_select %p396, %s393, 1
      %p398 = scmp.lt.s32.totalorder %s21, 0
      %s399 = scalar_select %p398, %s21, 0
      %s400 = sadd.s32 %s399, %s397
      %s401 = smul.addr %s395, 2
      %s402 = sadd.s32 %s400, %s401
      %s403 = smul.addr %s402, 8
      %s404 = scalar_lea.vmem %s3, %s403
      // Predicated region
      $region33: #{input_layer_forward.1} parent=31 // pred_check
        %p405 = pneg %p137
      $region34: #{input_layer_forward.1} parent=31 // pred_check_branch
        %407 = sbr.rel (%p405) target = $region36
      $region35: #{input_layer_forward.1} parent=31 // pred_region
        %s408 = smul.u32 2, %s20
      $region36: #{input_layer_forward.1} parent=31 // pred_fallthru
        _
    $region32: #{input_layer_forward.1} parent=5 // pred_fallthru
      _
    %p409 = scmp.le.s32.totalorder 2, %s9
    // Predicated region
    $region37: #{input_layer_forward.1} parent=5 // pred_check
      %p410 = pneg %p409
    $region38: #{input_layer_forward.1} parent=5 // pred_check_branch
      %412 = sbr.rel (%p410) target = $region40
    $region39: #{input_layer_forward.1} parent=5 // pred_region
      %s413 = ssub.s32 %s9, 2
      // Predicated region
      $region41: #{input_layer_forward.1} parent=39 // pred_check
        %p414 = pneg %p143
      $region42: #{input_layer_forward.1} parent=39 // pred_check_branch
        %416 = sbr.rel (%p414) target = $region44
      $region43: #{input_layer_forward.1} parent=39 // pred_region
        %s417 = smul.u32 2, %s23
        %p418 = scmp.lt.s32.totalorder %s22, 1
        %s419 = scalar_select %p418, %s22, 1
        %p420 = scmp.lt.s32.totalorder %s417, 1
        %s421 = scalar_select %p420, %s417, 1
        %p422 = scmp.lt.s32.totalorder %s24, 0
        %s423 = scalar_select %p422, %s24, 0
        %s424 = sadd.s32 %s423, %s421
        %s425 = smul.addr %s419, 2
        %s426 = sadd.s32 %s424, %s425
        %s427 = smul.addr %s426, 8
        %s428 = scalar_lea.vmem %s3, %s427
      $region44: #{input_layer_forward.1} parent=39 // pred_fallthru
        _
    $region40: #{input_layer_forward.1} parent=5 // pred_fallthru
      _
  $region6: #{input_layer_forward.1} parent=0 // loop_footer
    %s13 = sadd.s32 1, %s9
  $region7: #{input_layer_forward.1} parent=0 // loop_footer_branch
    %8 = sbr.rel target = $region3
  $region8: #{input_layer_forward.1} parent=0 // loop_exit
    _

</llo_original>
